<compile_context>
chip_gen: v5e
topology: v5e:2x2
jax: 0.10.0
libtpu: 0.0.40
codegen_flags: <defaults>
</compile_context>

<pallas_src>
import functools

import jax
import jax.numpy as jnp
from jax import lax
from jax.experimental import pallas as pl
from jax.experimental.pallas import tpu as pltpu


LANE = 128      # lane width: hidden dims are padded to a multiple of this
SUBLANE = 8     # sublane width: batch tiles are a multiple of this
MAX_TB = 2048   # batch-tile rows; per-step VMEM stays well under all limits


def _round_up(x: int, m: int) -> int:
    return ((x + m - 1) // m) * m


def _mlp_kernel(num_layers, x_ref, *refs):
    """Fused MLP over one batch tile.

    refs = (w0_ref, b0_ref, w1_ref, b1_ref, ..., out_ref)
    Hidden layers apply ReLU; the last layer does not (matches the module).
    Activations stay on-chip between layers; only x and the final output touch
    HBM per tile.
    """
    out_ref = refs[-1]
    param_refs = refs[:-1]

    h = x_ref[...]
    for li in range(num_layers):
        w = param_refs[2 * li][...]        # (in_dim, out_dim) (hidden dims padded)
        b = param_refs[2 * li + 1][...]    # (1, out_dim)
        h = jnp.dot(
            h, w,
            preferred_element_type=jnp.float32,
            precision=lax.Precision.HIGHEST,
        ) + b
        if li < num_layers - 1:
            h = jnp.maximum(h, 0.0)        # ReLU on hidden layers only
    out_ref[...] = h.astype(out_ref.dtype)


def mlp_forward(x, weights, biases, *, max_tb=MAX_TB):
    """Run the MUAPTClassifierMLP forward pass with a single fused Pallas call.

    x       : (batch, n_in) float32
    weights : list of (in_i, out_i) float32 arrays (transposed from torch (out,in))
    biases  : list of (out_i,) float32 arrays
    """
    num_layers = len(weights)
    batch, n_in = x.shape
    n_out = weights[-1].shape[1]

    # Layer widths: input & output stay at their real width (no HBM padding);
    # hidden widths are padded to a lane multiple so resident weights and
    # on-chip activations are lane-dense on the MXU.
    dims = [n_in] + [w.shape[1] for w in weights]
    pdims = list(dims)
    for i in range(1, num_layers):          # hidden dims only
        pdims[i] = _round_up(dims[i], LANE)

    # Batch tiling: rows only, no wrapper-side padding; Pallas masks the
    # partial edge block (rows are independent, so garbage tail rows in the
    # input tile never reach the real output).  Prefer an even tile count so
    # the "parallel" grid axis balances across v7x's two TensorCores.
    tb = min(_round_up(batch, SUBLANE), max_tb)
    grid = pl.cdiv(batch, tb)
    if grid > 1 and grid % 2 == 1:
        grid += 1
        tb = _round_up(pl.cdiv(batch, grid), SUBLANE)
        grid = pl.cdiv(batch, tb)

    # Pad weights/biases only on hidden-facing dims (zero padding is inert
    # through Linear + ReLU).  These are tiny and stay VMEM-resident across
    # all batch tiles (constant index maps).
    pw, pb = [], []
    for li in range(num_layers):
        w, b = weights[li], biases[li]
        wp_shape = (pdims[li], pdims[li + 1])
        if wp_shape == tuple(w.shape):
            w_p = jnp.asarray(w, jnp.float32)
        else:
            w_p = jnp.zeros(wp_shape, jnp.float32).at[: w.shape[0], : w.shape[1]].set(w)
        bp_shape = (1, pdims[li + 1])
        if bp_shape[1] == b.shape[0]:
            b_p = jnp.asarray(b, jnp.float32).reshape(1, -1)
        else:
            b_p = jnp.zeros(bp_shape, jnp.float32).at[0, : b.shape[0]].set(b)
        pw.append(w_p)
        pb.append(b_p)

    # Specs: x/out tiled over batch (auto double-buffered); params resident
    # (constant block index (0, 0)).
    in_specs = [pl.BlockSpec((tb, n_in), lambda i: (i, 0))]
    args = [x]
    for w_p, b_p in zip(pw, pb):
        in_specs.append(pl.BlockSpec(w_p.shape, lambda i: (0, 0)))
        in_specs.append(pl.BlockSpec(b_p.shape, lambda i: (0, 0)))
        args.append(w_p)
        args.append(b_p)
    out_spec = pl.BlockSpec((tb, n_out), lambda i: (i, 0))

    kernel = functools.partial(_mlp_kernel, num_layers)

    out = pl.pallas_call(
        kernel,
        out_shape=jax.ShapeDtypeStruct((batch, n_out), jnp.float32),
        grid_spec=pltpu.PrefetchScalarGridSpec(
            num_scalar_prefetch=0,
            grid=(grid,),
            in_specs=in_specs,
            out_specs=out_spec,
        ),
        compiler_params=pltpu.CompilerParams(
            dimension_semantics=("parallel",),
        ),
    )(*args)

    return out


def init_params(key, n_in, n_out, hidden_struct):
    """Deterministic init matching nn.Linear shapes (weights stored transposed)."""
    dims = [n_in] + list(hidden_struct) + [n_out]
    weights, biases = [], []
    for i in range(len(dims) - 1):
        fan_in, fan_out = dims[i], dims[i + 1]
        key, kw, kb = jax.random.split(key, 3)
        bound = 1.0 / jnp.sqrt(jnp.float32(fan_in))
        # torch Linear weight is (out, in); we store (in, out) for the kernel.
        w = jax.random.uniform(kw, (fan_in, fan_out), jnp.float32, -bound, bound)
        b = jax.random.uniform(kb, (fan_out,), jnp.float32, -bound, bound)
        weights.append(w)
        biases.append(b)
    return weights, biases


def reference_forward(x, weights, biases):
    """Pure-JAX reference of the PyTorch module's forward (same precision)."""
    h = x
    n = len(weights)
    for i, (w, b) in enumerate(zip(weights, biases)):
        h = jnp.dot(h, w, precision=lax.Precision.HIGHEST) + b
        if i < n - 1:
            h = jnp.maximum(h, 0.0)
    return h


if __name__ == "__main__":
    key = jax.random.PRNGKey(0)

    # --- small test consistent with an MLP classifier on MUAPT features ---
    batch, n_in, n_out = 8, 16, 4
    hidden_struct = (32, 32)

    key, kx = jax.random.split(key)
    x = jax.random.normal(kx, (batch, n_in), jnp.float32)
    weights, biases = init_params(key, n_in, n_out, hidden_struct)

    out = jax.block_until_ready(mlp_forward(x, weights, biases))
    ref = reference_forward(x, weights, biases)
    assert out.shape == (batch, n_out)
    assert jnp.allclose(out, ref, atol=1e-5, rtol=1e-5), "mismatch vs reference (small)"

    # --- larger batch: default tiling (single big tile, no padding passes) ---
    key, kx2 = jax.random.split(key)
    batch2 = 1200
    x2 = jax.random.normal(kx2, (batch2, n_in), jnp.float32)
    out2 = jax.block_until_ready(mlp_forward(x2, weights, biases))
    ref2 = reference_forward(x2, weights, biases)
    assert out2.shape == (batch2, n_out)
    assert jnp.allclose(out2, ref2, atol=1e-4, rtol=1e-4), "mismatch vs reference (big)"

    # --- force a multi-tile grid with a partial (masked) edge block ---
    out3 = jax.block_until_ready(mlp_forward(x2, weights, biases, max_tb=512))
    assert out3.shape == (batch2, n_out)
    assert jnp.allclose(out3, ref2, atol=1e-4, rtol=1e-4), "mismatch vs reference (tiled)"

    # --- no-hidden-layer branch of the module (single Linear, no ReLU) ---
    w0, b0 = init_params(jax.random.PRNGKey(1), n_in, n_out, ())
    out4 = jax.block_until_ready(mlp_forward(x, w0, b0))
    ref4 = reference_forward(x, w0, b0)
    assert jnp.allclose(out4, ref4, atol=1e-5, rtol=1e-5), "mismatch vs reference (no hidden)"

    print("KERNEL_OK")
</pallas_src>

<mosaic_0001>
module attributes {stable_mosaic.version = 11 : i64} {
  func.func @_mlp_kernel(%arg0: i32, %arg1: memref<8x16xf32, #tpu.memory_space<vmem>>, %arg2: memref<16x128xf32, #tpu.memory_space<vmem>>, %arg3: memref<1x128xf32, #tpu.memory_space<vmem>>, %arg4: memref<128x128xf32, #tpu.memory_space<vmem>>, %arg5: memref<1x128xf32, #tpu.memory_space<vmem>>, %arg6: memref<128x4xf32, #tpu.memory_space<vmem>>, %arg7: memref<1x4xf32, #tpu.memory_space<vmem>>, %arg8: memref<8x4xf32, #tpu.memory_space<vmem>>) attributes {dimension_semantics = [#tpu.dimension_semantics<parallel>], iteration_bounds = array<i64: 1>, scalar_prefetch = 0 : i64, scratch_operands = 0 : i64, tpu.core_type = #tpu.core_type<tc>, window_params = [{transform_indices = @transform_0, window_bounds = array<i64: 8, 16>}, {pipeline_mode = #tpu.pipeline_mode<synchronous>, transform_indices = @transform_1, window_bounds = array<i64: 16, 128>}, {pipeline_mode = #tpu.pipeline_mode<synchronous>, transform_indices = @transform_2, window_bounds = array<i64: 1, 128>}, {pipeline_mode = #tpu.pipeline_mode<synchronous>, transform_indices = @transform_3, window_bounds = array<i64: 128, 128>}, {pipeline_mode = #tpu.pipeline_mode<synchronous>, transform_indices = @transform_4, window_bounds = array<i64: 1, 128>}, {pipeline_mode = #tpu.pipeline_mode<synchronous>, transform_indices = @transform_5, window_bounds = array<i64: 128, 4>}, {pipeline_mode = #tpu.pipeline_mode<synchronous>, transform_indices = @transform_6, window_bounds = array<i64: 1, 4>}, {transform_indices = @transform_7, window_bounds = array<i64: 8, 4>}]} {
    %c0 = arith.constant 0 : index
    %c0_0 = arith.constant 0 : index
    %0 = vector.load %arg1[%c0, %c0_0] : memref<8x16xf32, #tpu.memory_space<vmem>>, vector<8x16xf32>
    %c0_1 = arith.constant 0 : index
    %c0_2 = arith.constant 0 : index
    %1 = vector.load %arg2[%c0_1, %c0_2] : memref<16x128xf32, #tpu.memory_space<vmem>>, vector<16x128xf32>
    %c0_3 = arith.constant 0 : index
    %c0_4 = arith.constant 0 : index
    %2 = vector.load %arg3[%c0_3, %c0_4] : memref<1x128xf32, #tpu.memory_space<vmem>>, vector<1x128xf32>
    %cst = arith.constant dense<0.000000e+00> : vector<8x128xf32>
    %3 = tpu.matmul %0, %1, %cst {dimension_numbers = #tpu.dot_dimension_numbers<[1], [0], [0], [1], [0, 0, 1, 1], [], []>, precision = #tpu.contract_precision<fp32>} : vector<8x16xf32>, vector<16x128xf32>, vector<8x128xf32> -> vector<8x128xf32>
    %4 = vector.broadcast %2 : vector<1x128xf32> to vector<8x128xf32>
    %5 = arith.addf %3, %4 : vector<8x128xf32>
    %cst_5 = arith.constant 0.000000e+00 : f32
    %6 = vector.broadcast %cst_5 : f32 to vector<8x128xf32>
    %7 = arith.maximumf %5, %6 : vector<8x128xf32>
    %c0_6 = arith.constant 0 : index
    %c0_7 = arith.constant 0 : index
    %8 = vector.load %arg4[%c0_6, %c0_7] : memref<128x128xf32, #tpu.memory_space<vmem>>, vector<128x128xf32>
    %c0_8 = arith.constant 0 : index
    %c0_9 = arith.constant 0 : index
    %9 = vector.load %arg5[%c0_8, %c0_9] : memref<1x128xf32, #tpu.memory_space<vmem>>, vector<1x128xf32>
    %cst_10 = arith.constant dense<0.000000e+00> : vector<8x128xf32>
    %10 = tpu.matmul %7, %8, %cst_10 {dimension_numbers = #tpu.dot_dimension_numbers<[1], [0], [0], [1], [0, 0, 1, 1], [], []>, precision = #tpu.contract_precision<fp32>} : vector<8x128xf32>, vector<128x128xf32>, vector<8x128xf32> -> vector<8x128xf32>
    %11 = vector.broadcast %9 : vector<1x128xf32> to vector<8x128xf32>
    %12 = arith.addf %10, %11 : vector<8x128xf32>
    %cst_11 = arith.constant 0.000000e+00 : f32
    %13 = vector.broadcast %cst_11 : f32 to vector<8x128xf32>
    %14 = arith.maximumf %12, %13 : vector<8x128xf32>
    %c0_12 = arith.constant 0 : index
    %c0_13 = arith.constant 0 : index
    %15 = vector.load %arg6[%c0_12, %c0_13] : memref<128x4xf32, #tpu.memory_space<vmem>>, vector<128x4xf32>
    %c0_14 = arith.constant 0 : index
    %c0_15 = arith.constant 0 : index
    %16 = vector.load %arg7[%c0_14, %c0_15] : memref<1x4xf32, #tpu.memory_space<vmem>>, vector<1x4xf32>
    %cst_16 = arith.constant dense<0.000000e+00> : vector<8x4xf32>
    %17 = tpu.matmul %14, %15, %cst_16 {dimension_numbers = #tpu.dot_dimension_numbers<[1], [0], [0], [1], [0, 0, 1, 1], [], []>, precision = #tpu.contract_precision<fp32>} : vector<8x128xf32>, vector<128x4xf32>, vector<8x4xf32> -> vector<8x4xf32>
    %18 = vector.broadcast %16 : vector<1x4xf32> to vector<8x4xf32>
    %19 = arith.addf %17, %18 : vector<8x4xf32>
    %c0_17 = arith.constant 0 : index
    %c0_18 = arith.constant 0 : index
    %20 = vector.load %arg8[%c0_17, %c0_18] : memref<8x4xf32, #tpu.memory_space<vmem>>, vector<8x4xf32>
    tpu.vector_store %arg8[%c0_17, %c0_18], %19 {strides = array<i32>} : memref<8x4xf32, #tpu.memory_space<vmem>>, vector<8x4xf32>,
    return
  }
  func.func @transform_0(%arg0: i32) -> (i32, i32) {
    %c0_i32 = arith.constant 0 : i32
    %c0_i32_0 = arith.constant 0 : i32
    return %arg0, %c0_i32 : i32, i32
  }
  func.func @transform_1(%arg0: i32) -> (i32, i32) {
    %c0_i32 = arith.constant 0 : i32
    %c0_i32_0 = arith.constant 0 : i32
    %c0_i32_1 = arith.constant 0 : i32
    return %c0_i32, %c0_i32_0 : i32, i32
  }
  func.func @transform_2(%arg0: i32) -> (i32, i32) {
    %c0_i32 = arith.constant 0 : i32
    %c0_i32_0 = arith.constant 0 : i32
    %c0_i32_1 = arith.constant 0 : i32
    return %c0_i32, %c0_i32_0 : i32, i32
  }
  func.func @transform_3(%arg0: i32) -> (i32, i32) {
    %c0_i32 = arith.constant 0 : i32
    %c0_i32_0 = arith.constant 0 : i32
    %c0_i32_1 = arith.constant 0 : i32
    return %c0_i32, %c0_i32_0 : i32, i32
  }
  func.func @transform_4(%arg0: i32) -> (i32, i32) {
    %c0_i32 = arith.constant 0 : i32
    %c0_i32_0 = arith.constant 0 : i32
    %c0_i32_1 = arith.constant 0 : i32
    return %c0_i32, %c0_i32_0 : i32, i32
  }
  func.func @transform_5(%arg0: i32) -> (i32, i32) {
    %c0_i32 = arith.constant 0 : i32
    %c0_i32_0 = arith.constant 0 : i32
    %c0_i32_1 = arith.constant 0 : i32
    return %c0_i32, %c0_i32_0 : i32, i32
  }
  func.func @transform_6(%arg0: i32) -> (i32, i32) {
    %c0_i32 = arith.constant 0 : i32
    %c0_i32_0 = arith.constant 0 : i32
    %c0_i32_1 = arith.constant 0 : i32
    return %c0_i32, %c0_i32_0 : i32, i32
  }
  func.func @transform_7(%arg0: i32) -> (i32, i32) {
    %c0_i32 = arith.constant 0 : i32
    %c0_i32_0 = arith.constant 0 : i32
    return %arg0, %c0_i32 : i32, i32
  }
}

</mosaic_0001>

<llo_original>
// kernel: tpu_custom_call.1
$region0: #{tpu_custom_call.1}
  #allocation0 [shape = 'u32[]', space=smem, size = 0x4, offset = 0x4, fixed_abs, tag = 'smem constant byte address 0x4 - core index']
  #allocation1 [shape = 'u32[72,128]{1,0:T(1,128)}', space=vmem, size = 0x9000, scoped, tag = 'internal scratch']
  %s0 = inlined_call_operand.hbm [shape: f32[8,16], index: 0, kind: input, shape index: {}]
  %s1 = inlined_call_operand.hbm [shape: f32[16,128], index: 1, kind: input, shape index: {}]
  %s2 = inlined_call_operand.vmem [shape: f32[1,128], index: 2, kind: input, shape index: {}]
  %s3 = inlined_call_operand.vmem [shape: f32[128,128], index: 3, kind: input, shape index: {}]
  %s4 = inlined_call_operand.vmem [shape: f32[1,128], index: 4, kind: input, shape index: {}]
  %s5 = inlined_call_operand.vmem [shape: f32[128,4], index: 5, kind: input, shape index: {}]
  %s6 = inlined_call_operand.vmem [shape: f32[1,4], index: 6, kind: input, shape index: {}]
  %s7 = inlined_call_operand.vmem [shape: f32[8,4], index: 7, kind: output, shape index: {}]
  %s8 = sld [smem:[#allocation0]]
  $region46: #{tpu_custom_call.1} parent=0
    _
  %s10 = ssub.s32 1, %s8
  %s11 = scalar_select 0, %s10, %s8
  $region1: #{tpu_custom_call.1} parent=0
    #allocation2 [shape = 'u8[4096]{0}', space=vmem, size = 0x1000, scoped, tag = 'input window, operand 0, single buffered']
    #allocation3 [shape = 's32[1]{0}', space=sflag, size = 0x4, scoped, tag = 'scoped memory for tpu_custom_call.1']
    #allocation4 [shape = 'u8[8192]{0}', space=vmem, size = 0x2000, scoped, tag = 'input window, operand 1, single buffered']
    #allocation5 [shape = 's32[1]{0}', space=sflag, size = 0x4, scoped, tag = 'scoped memory for tpu_custom_call.1']
    %12 = vsyncpa [#allocation3], 0
    %13 = vsyncpa [#allocation5], 0
    // Predicated region
    $region2: #{tpu_custom_call.1} parent=1 // pred_check
      _
    $region3: #{tpu_custom_call.1} parent=1 // pred_check_branch
      %15 = sbr.rel (0) target = $region5
    $region4: #{tpu_custom_call.1} parent=1 // pred_region
      %17 = vsyncadd [#allocation3], 0
      %s19 = sshll.u32 %s0, 4
      %s20 = int_to_ptr.hbm [resolvable:$true] %s19
      %s21 = sshll.u32 [#allocation2], 4
      %s22 = int_to_ptr.vmem [resolvable:$true] %s21
      %24 = dma.hbm_to_vmem [thread:$0]  %s20, 128, %s22, [#allocation3]
    $region5: #{tpu_custom_call.1} parent=1 // pred_fallthru
      _
    // Predicated region
    $region6: #{tpu_custom_call.1} parent=1 // pred_check
      _
    $region7: #{tpu_custom_call.1} parent=1 // pred_check_branch
      %26 = sbr.rel (0) target = $region9
    $region8: #{tpu_custom_call.1} parent=1 // pred_region
      %28 = vsyncadd [#allocation5], 0
      %s29 = sshll.u32 %s1, 4
      %s30 = int_to_ptr.hbm [resolvable:$true] %s29
      %s31 = sshll.u32 [#allocation4], 4
      %s32 = int_to_ptr.vmem [resolvable:$true] %s31
      %37 = dma.hbm_to_vmem [thread:$0]  %s30, 256, %s32, [#allocation5], 128, 128, 8
    $region9: #{tpu_custom_call.1} parent=1 // pred_fallthru
      _
    // Predicated region
    $region10: #{tpu_custom_call.1} parent=1 // pred_check
      _
    $region11: #{tpu_custom_call.1} parent=1 // pred_check_branch
      %39 = sbr.rel (0) target = $region13
    $region12: #{tpu_custom_call.1} parent=1 // pred_region
      _
    $region13: #{tpu_custom_call.1} parent=1 // pred_fallthru
      _
    // Predicated region
    $region14: #{tpu_custom_call.1} parent=1 // pred_check
      _
    $region15: #{tpu_custom_call.1} parent=1 // pred_check_branch
      %41 = sbr.rel (0) target = $region17
    $region16: #{tpu_custom_call.1} parent=1 // pred_region
      _
    $region17: #{tpu_custom_call.1} parent=1 // pred_fallthru
      _
    // Predicated region
    $region18: #{tpu_custom_call.1} parent=1 // pred_check
      _
    $region19: #{tpu_custom_call.1} parent=1 // pred_check_branch
      %43 = sbr.rel (0) target = $region21
    $region20: #{tpu_custom_call.1} parent=1 // pred_region
      _
    $region21: #{tpu_custom_call.1} parent=1 // pred_fallthru
      _
    // Predicated region
    $region22: #{tpu_custom_call.1} parent=1 // pred_check
      _
    $region23: #{tpu_custom_call.1} parent=1 // pred_check_branch
      %45 = sbr.rel (0) target = $region25
    $region24: #{tpu_custom_call.1} parent=1 // pred_region
      _
    $region25: #{tpu_custom_call.1} parent=1 // pred_fallthru
      _
    // Predicated region
    $region26: #{tpu_custom_call.1} parent=1 // pred_check
      _
    $region27: #{tpu_custom_call.1} parent=1 // pred_check_branch
      %47 = sbr.rel (0) target = $region29
    $region28: #{tpu_custom_call.1} parent=1 // pred_region
      _
    $region29: #{tpu_custom_call.1} parent=1 // pred_fallthru
      _
    // Predicated region
    $region30: #{tpu_custom_call.1} parent=1 // pred_check
      _
    $region31: #{tpu_custom_call.1} parent=1 // pred_check_branch
      %49 = sbr.rel (0) target = $region33
    $region32: #{tpu_custom_call.1} parent=1 // pred_region
      %51 = dma.done [#allocation3], 128
    $region33: #{tpu_custom_call.1} parent=1 // pred_fallthru
      _
    // Predicated region
    $region34: #{tpu_custom_call.1} parent=1 // pred_check
      _
    $region35: #{tpu_custom_call.1} parent=1 // pred_check_branch
      %53 = sbr.rel (0) target = $region37
    $region36: #{tpu_custom_call.1} parent=1 // pred_region
      %55 = dma.done [#allocation5], 256
    $region37: #{tpu_custom_call.1} parent=1 // pred_fallthru
      _
    %v56 = vld [vmem:[#allocation2] sm:$0xff]
    %v57 = vld [vmem:[#allocation4] sm:$0xff]
    %v58 = vld [vmem:[#allocation4 + $0x8] sm:$0xff]
    %v59 = vld [vmem:[%s2] sm:$0x1]
    %v61 = vperm.slane %v59, 0
    %vm63 = vcmask 130048
    %v65 = vsel %vm63, %v56, 0
    %67 = vmatpush.msra.mxu0 0.0
    %68 = vmatpush.msra.mxu0 0.0
    %69 = vmatpush.msra.mxu0 0.0
    %70 = vmatpush.msra.mxu0 0.0
    %71 = vmatpush.msra.mxu0 0.0
    %72 = vmatpush.msra.mxu0 0.0
    %73 = vmatpush.msra.mxu0 0.0
    %74 = vmatpush.msra.mxu0 0.0
    %75 = vmatpush.msra.mxu0 0.0
    %76 = vmatpush.msra.mxu0 0.0
    %77 = vmatpush.msra.mxu0 0.0
    %78 = vmatpush.msra.mxu0 0.0
    %79 = vmatpush.msra.mxu0 0.0
    %80 = vmatpush.msra.mxu0 0.0
    %v81 = vand.u32 %v58, 4294901760
    %82 = vmatpush.msra.mxu0 %v81
    %v83 = vand.u32 %v57, 4294901760
    %84 = vmatpush.msra.mxu0 %v83
    %v85 = vand.u32 %v65, 4294901760
    %v86 = vsub.f32 %v65, %v85
    %v87 = vand.u32 %v86, 4294901760
    %v88 = vsub.f32 %v86, %v87
    %v89 = vand.u32 %v88, 4294901760
    %90 = vmatmul.f32.gmra.mxu0 %v89
    %v91 = vpop.f32.mrf.mxu0
    %v92 = vadd.f32 %v61, %v91
    %93 = vdwg.mxu0
    %94 = vmatpush.msra.mxu0 0.0
    %95 = vmatpush.msra.mxu0 0.0
    %96 = vmatpush.msra.mxu0 0.0
    %97 = vmatpush.msra.mxu0 0.0
    %98 = vmatpush.msra.mxu0 0.0
    %99 = vmatpush.msra.mxu0 0.0
    %100 = vmatpush.msra.mxu0 0.0
    %101 = vmatpush.msra.mxu0 0.0
    %102 = vmatpush.msra.mxu0 0.0
    %103 = vmatpush.msra.mxu0 0.0
    %104 = vmatpush.msra.mxu0 0.0
    %105 = vmatpush.msra.mxu0 0.0
    %106 = vmatpush.msra.mxu0 0.0
    %107 = vmatpush.msra.mxu0 0.0
    %v108 = vand.u32 %v58, 4294901760
    %v109 = vsub.f32 %v58, %v108
    %v110 = vand.u32 %v109, 4294901760
    %v111 = vsub.f32 %v109, %v110
    %v112 = vand.u32 %v111, 4294901760
    %113 = vmatpush.msra.mxu0 %v112
    %v114 = vand.u32 %v57, 4294901760
    %v115 = vsub.f32 %v57, %v114
    %v116 = vand.u32 %v115, 4294901760
    %v117 = vsub.f32 %v115, %v116
    %v118 = vand.u32 %v117, 4294901760
    %119 = vmatpush.msra.mxu0 %v118
    %v120 = vand.u32 %v65, 4294901760
    %121 = vmatmul.f32.gmra.mxu0 %v120
    %v122 = vpop.f32.mrf.mxu0
    %v123 = vadd.f32 %v92, %v122
    %124 = vdwg.mxu0
    %125 = vmatpush.msra.mxu0 0.0
    %126 = vmatpush.msra.mxu0 0.0
    %127 = vmatpush.msra.mxu0 0.0
    %128 = vmatpush.msra.mxu0 0.0
    %129 = vmatpush.msra.mxu0 0.0
    %130 = vmatpush.msra.mxu0 0.0
    %131 = vmatpush.msra.mxu0 0.0
    %132 = vmatpush.msra.mxu0 0.0
    %133 = vmatpush.msra.mxu0 0.0
    %134 = vmatpush.msra.mxu0 0.0
    %135 = vmatpush.msra.mxu0 0.0
    %136 = vmatpush.msra.mxu0 0.0
    %137 = vmatpush.msra.mxu0 0.0
    %138 = vmatpush.msra.mxu0 0.0
    %v139 = vand.u32 %v58, 4294901760
    %v140 = vsub.f32 %v58, %v139
    %141 = vmatpush.msra.mxu0 %v140
    %v142 = vand.u32 %v57, 4294901760
    %v143 = vsub.f32 %v57, %v142
    %144 = vmatpush.msra.mxu0 %v143
    %v145 = vand.u32 %v65, 4294901760
    %v146 = vsub.f32 %v65, %v145
    %147 = vmatmul.f32.gmra.mxu0 %v146
    %v148 = vpop.f32.mrf.mxu0
    %v149 = vadd.f32 %v123, %v148
    %150 = vdwg.mxu0
    %151 = vmatpush.msra.mxu0 0.0
    %152 = vmatpush.msra.mxu0 0.0
    %153 = vmatpush.msra.mxu0 0.0
    %154 = vmatpush.msra.mxu0 0.0
    %155 = vmatpush.msra.mxu0 0.0
    %156 = vmatpush.msra.mxu0 0.0
    %157 = vmatpush.msra.mxu0 0.0
    %158 = vmatpush.msra.mxu0 0.0
    %159 = vmatpush.msra.mxu0 0.0
    %160 = vmatpush.msra.mxu0 0.0
    %161 = vmatpush.msra.mxu0 0.0
    %162 = vmatpush.msra.mxu0 0.0
    %163 = vmatpush.msra.mxu0 0.0
    %164 = vmatpush.msra.mxu0 0.0
    %v165 = vand.u32 %v58, 4294901760
    %166 = vmatpush.msra.mxu0 %v165
    %v167 = vand.u32 %v57, 4294901760
    %168 = vmatpush.msra.mxu0 %v167
    %v169 = vand.u32 %v65, 4294901760
    %v170 = vsub.f32 %v65, %v169
    %v171 = vand.u32 %v170, 4294901760
    %172 = vmatmul.f32.gmra.mxu0 %v171
    %v173 = vpop.f32.mrf.mxu0
    %v174 = vadd.f32 %v149, %v173
    %175 = vdwg.mxu0
    %176 = vmatpush.msra.mxu0 0.0
    %177 = vmatpush.msra.mxu0 0.0
    %178 = vmatpush.msra.mxu0 0.0
    %179 = vmatpush.msra.mxu0 0.0
    %180 = vmatpush.msra.mxu0 0.0
    %181 = vmatpush.msra.mxu0 0.0
    %182 = vmatpush.msra.mxu0 0.0
    %183 = vmatpush.msra.mxu0 0.0
    %184 = vmatpush.msra.mxu0 0.0
    %185 = vmatpush.msra.mxu0 0.0
    %186 = vmatpush.msra.mxu0 0.0
    %187 = vmatpush.msra.mxu0 0.0
    %188 = vmatpush.msra.mxu0 0.0
    %189 = vmatpush.msra.mxu0 0.0
    %v190 = vand.u32 %v58, 4294901760
    %v191 = vsub.f32 %v58, %v190
    %v192 = vand.u32 %v191, 4294901760
    %193 = vmatpush.msra.mxu0 %v192
    %v194 = vand.u32 %v57, 4294901760
    %v195 = vsub.f32 %v57, %v194
    %v196 = vand.u32 %v195, 4294901760
    %197 = vmatpush.msra.mxu0 %v196
    %v198 = vand.u32 %v65, 4294901760
    %199 = vmatmul.f32.gmra.mxu0 %v198
    %v200 = vpop.f32.mrf.mxu0
    %v201 = vadd.f32 %v174, %v200
    %202 = vdwg.mxu0
    %203 = vmatpush.msra.mxu0 0.0
    %204 = vmatpush.msra.mxu0 0.0
    %205 = vmatpush.msra.mxu0 0.0
    %206 = vmatpush.msra.mxu0 0.0
    %207 = vmatpush.msra.mxu0 0.0
    %208 = vmatpush.msra.mxu0 0.0
    %209 = vmatpush.msra.mxu0 0.0
    %210 = vmatpush.msra.mxu0 0.0
    %211 = vmatpush.msra.mxu0 0.0
    %212 = vmatpush.msra.mxu0 0.0
    %213 = vmatpush.msra.mxu0 0.0
    %214 = vmatpush.msra.mxu0 0.0
    %215 = vmatpush.msra.mxu0 0.0
    %216 = vmatpush.msra.mxu0 0.0
    %v217 = vand.u32 %v58, 4294901760
    %218 = vmatpush.msra.mxu0 %v217
    %v219 = vand.u32 %v57, 4294901760
    %220 = vmatpush.msra.mxu0 %v219
    %v221 = vand.u32 %v65, 4294901760
    %222 = vmatmul.f32.gmra.mxu0 %v221
    %v223 = vpop.f32.mrf.mxu0
    %v224 = vadd.f32 %v201, %v223
    %225 = vdwg.mxu0
    %v226 = vmax.f32 %v224, 0.0
    %v227 = vld [vmem:[%s3] sm:$0xff]
    %v228 = vld [vmem:[%s3 + $0x8] sm:$0xff]
    %v229 = vld [vmem:[%s3 + $0x10] sm:$0xff]
    %v230 = vld [vmem:[%s3 + $0x18] sm:$0xff]
    %v231 = vld [vmem:[%s3 + $0x20] sm:$0xff]
    %v232 = vld [vmem:[%s3 + $0x28] sm:$0xff]
    %v233 = vld [vmem:[%s3 + $0x30] sm:$0xff]
    %v234 = vld [vmem:[%s3 + $0x38] sm:$0xff]
    %v235 = vld [vmem:[%s3 + $0x40] sm:$0xff]
    %v236 = vld [vmem:[%s3 + $0x48] sm:$0xff]
    %v237 = vld [vmem:[%s3 + $0x50] sm:$0xff]
    %v238 = vld [vmem:[%s3 + $0x58] sm:$0xff]
    %v239 = vld [vmem:[%s3 + $0x60] sm:$0xff]
    %v240 = vld [vmem:[%s3 + $0x68] sm:$0xff]
    %v241 = vld [vmem:[%s3 + $0x70] sm:$0xff]
    %v242 = vld [vmem:[%s3 + $0x78] sm:$0xff]
    %v243 = vld [vmem:[%s4] sm:$0x1]
    %v245 = vperm.slane %v243, 0
    %v247 = vand.u32 %v242, 4294901760
    %248 = vmatpush.msra.mxu0 %v247
    %v249 = vand.u32 %v241, 4294901760
    %250 = vmatpush.msra.mxu0 %v249
    %v251 = vand.u32 %v240, 4294901760
    %252 = vmatpush.msra.mxu0 %v251
    %v253 = vand.u32 %v239, 4294901760
    %254 = vmatpush.msra.mxu0 %v253
    %v255 = vand.u32 %v238, 4294901760
    %256 = vmatpush.msra.mxu0 %v255
    %v257 = vand.u32 %v237, 4294901760
    %258 = vmatpush.msra.mxu0 %v257
    %v259 = vand.u32 %v236, 4294901760
    %260 = vmatpush.msra.mxu0 %v259
    %v261 = vand.u32 %v235, 4294901760
    %262 = vmatpush.msra.mxu0 %v261
    %v263 = vand.u32 %v234, 4294901760
    %264 = vmatpush.msra.mxu0 %v263
    %v265 = vand.u32 %v233, 4294901760
    %266 = vmatpush.msra.mxu0 %v265
    %v267 = vand.u32 %v232, 4294901760
    %268 = vmatpush.msra.mxu0 %v267
    %v269 = vand.u32 %v231, 4294901760
    %270 = vmatpush.msra.mxu0 %v269
    %v271 = vand.u32 %v230, 4294901760
    %272 = vmatpush.msra.mxu0 %v271
    %v273 = vand.u32 %v229, 4294901760
    %274 = vmatpush.msra.mxu0 %v273
    %v275 = vand.u32 %v228, 4294901760
    %276 = vmatpush.msra.mxu0 %v275
    %v277 = vand.u32 %v227, 4294901760
    %278 = vmatpush.msra.mxu0 %v277
    %v279 = vand.u32 %v226, 4294901760
    %v280 = vsub.f32 %v226, %v279
    %v281 = vand.u32 %v280, 4294901760
    %v282 = vsub.f32 %v280, %v281
    %v283 = vand.u32 %v282, 4294901760
    %284 = vmatmul.f32.gmra.mxu0 %v283
    %v285 = vpop.f32.mrf.mxu0
    %v286 = vadd.f32 %v245, %v285
    %287 = vdwg.mxu0
    %v288 = vand.u32 %v242, 4294901760
    %v289 = vsub.f32 %v242, %v288
    %v290 = vand.u32 %v289, 4294901760
    %v291 = vsub.f32 %v289, %v290
    %v292 = vand.u32 %v291, 4294901760
    %293 = vmatpush.msra.mxu0 %v292
    %v294 = vand.u32 %v241, 4294901760
    %v295 = vsub.f32 %v241, %v294
    %v296 = vand.u32 %v295, 4294901760
    %v297 = vsub.f32 %v295, %v296
    %v298 = vand.u32 %v297, 4294901760
    %299 = vmatpush.msra.mxu0 %v298
    %v300 = vand.u32 %v240, 4294901760
    %v301 = vsub.f32 %v240, %v300
    %v302 = vand.u32 %v301, 4294901760
    %v303 = vsub.f32 %v301, %v302
    %v304 = vand.u32 %v303, 4294901760
    %305 = vmatpush.msra.mxu0 %v304
    %v306 = vand.u32 %v239, 4294901760
    %v307 = vsub.f32 %v239, %v306
    %v308 = vand.u32 %v307, 4294901760
    %v309 = vsub.f32 %v307, %v308
    %v310 = vand.u32 %v309, 4294901760
    %311 = vmatpush.msra.mxu0 %v310
    %v312 = vand.u32 %v238, 4294901760
    %v313 = vsub.f32 %v238, %v312
    %v314 = vand.u32 %v313, 4294901760
    %v315 = vsub.f32 %v313, %v314
    %v316 = vand.u32 %v315, 4294901760
    %317 = vmatpush.msra.mxu0 %v316
    %v318 = vand.u32 %v237, 4294901760
    %v319 = vsub.f32 %v237, %v318
    %v320 = vand.u32 %v319, 4294901760
    %v321 = vsub.f32 %v319, %v320
    %v322 = vand.u32 %v321, 4294901760
    %323 = vmatpush.msra.mxu0 %v322
    %v324 = vand.u32 %v236, 4294901760
    %v325 = vsub.f32 %v236, %v324
    %v326 = vand.u32 %v325, 4294901760
    %v327 = vsub.f32 %v325, %v326
    %v328 = vand.u32 %v327, 4294901760
    %329 = vmatpush.msra.mxu0 %v328
    %v330 = vand.u32 %v235, 4294901760
    %v331 = vsub.f32 %v235, %v330
    %v332 = vand.u32 %v331, 4294901760
    %v333 = vsub.f32 %v331, %v332
    %v334 = vand.u32 %v333, 4294901760
    %335 = vmatpush.msra.mxu0 %v334
    %v336 = vand.u32 %v234, 4294901760
    %v337 = vsub.f32 %v234, %v336
    %v338 = vand.u32 %v337, 4294901760
    %v339 = vsub.f32 %v337, %v338
    %v340 = vand.u32 %v339, 4294901760
    %341 = vmatpush.msra.mxu0 %v340
    %v342 = vand.u32 %v233, 4294901760
    %v343 = vsub.f32 %v233, %v342
    %v344 = vand.u32 %v343, 4294901760
    %v345 = vsub.f32 %v343, %v344
    %v346 = vand.u32 %v345, 4294901760
    %347 = vmatpush.msra.mxu0 %v346
    %v348 = vand.u32 %v232, 4294901760
    %v349 = vsub.f32 %v232, %v348
    %v350 = vand.u32 %v349, 4294901760
    %v351 = vsub.f32 %v349, %v350
    %v352 = vand.u32 %v351, 4294901760
    %353 = vmatpush.msra.mxu0 %v352
    %v354 = vand.u32 %v231, 4294901760
    %v355 = vsub.f32 %v231, %v354
    %v356 = vand.u32 %v355, 4294901760
    %v357 = vsub.f32 %v355, %v356
    %v358 = vand.u32 %v357, 4294901760
    %359 = vmatpush.msra.mxu0 %v358
    %v360 = vand.u32 %v230, 4294901760
    %v361 = vsub.f32 %v230, %v360
    %v362 = vand.u32 %v361, 4294901760
    %v363 = vsub.f32 %v361, %v362
    %v364 = vand.u32 %v363, 4294901760
    %365 = vmatpush.msra.mxu0 %v364
    %v366 = vand.u32 %v229, 4294901760
    %v367 = vsub.f32 %v229, %v366
    %v368 = vand.u32 %v367, 4294901760
    %v369 = vsub.f32 %v367, %v368
    %v370 = vand.u32 %v369, 4294901760
    %371 = vmatpush.msra.mxu0 %v370
    %v372 = vand.u32 %v228, 4294901760
    %v373 = vsub.f32 %v228, %v372
    %v374 = vand.u32 %v373, 4294901760
    %v375 = vsub.f32 %v373, %v374
    %v376 = vand.u32 %v375, 4294901760
    %377 = vmatpush.msra.mxu0 %v376
    %v378 = vand.u32 %v227, 4294901760
    %v379 = vsub.f32 %v227, %v378
    %v380 = vand.u32 %v379, 4294901760
    %v381 = vsub.f32 %v379, %v380
    %v382 = vand.u32 %v381, 4294901760
    %383 = vmatpush.msra.mxu0 %v382
    %v384 = vand.u32 %v226, 4294901760
    %385 = vmatmul.f32.gmra.mxu0 %v384
    %v386 = vpop.f32.mrf.mxu0
    %v387 = vadd.f32 %v286, %v386
    %388 = vdwg.mxu0
    %v389 = vand.u32 %v242, 4294901760
    %v390 = vsub.f32 %v242, %v389
    %391 = vmatpush.msra.mxu0 %v390
    %v392 = vand.u32 %v241, 4294901760
    %v393 = vsub.f32 %v241, %v392
    %394 = vmatpush.msra.mxu0 %v393
    %v395 = vand.u32 %v240, 4294901760
    %v396 = vsub.f32 %v240, %v395
    %397 = vmatpush.msra.mxu0 %v396
    %v398 = vand.u32 %v239, 4294901760
    %v399 = vsub.f32 %v239, %v398
    %400 = vmatpush.msra.mxu0 %v399
    %v401 = vand.u32 %v238, 4294901760
    %v402 = vsub.f32 %v238, %v401
    %403 = vmatpush.msra.mxu0 %v402
    %v404 = vand.u32 %v237, 4294901760
    %v405 = vsub.f32 %v237, %v404
    %406 = vmatpush.msra.mxu0 %v405
    %v407 = vand.u32 %v236, 4294901760
    %v408 = vsub.f32 %v236, %v407
    %409 = vmatpush.msra.mxu0 %v408
    %v410 = vand.u32 %v235, 4294901760
    %v411 = vsub.f32 %v235, %v410
    %412 = vmatpush.msra.mxu0 %v411
    %v413 = vand.u32 %v234, 4294901760
    %v414 = vsub.f32 %v234, %v413
    %415 = vmatpush.msra.mxu0 %v414
    %v416 = vand.u32 %v233, 4294901760
    %v417 = vsub.f32 %v233, %v416
    %418 = vmatpush.msra.mxu0 %v417
    %v419 = vand.u32 %v232, 4294901760
    %v420 = vsub.f32 %v232, %v419
    %421 = vmatpush.msra.mxu0 %v420
    %v422 = vand.u32 %v231, 4294901760
    %v423 = vsub.f32 %v231, %v422
    %424 = vmatpush.msra.mxu0 %v423
    %v425 = vand.u32 %v230, 4294901760
    %v426 = vsub.f32 %v230, %v425
    %427 = vmatpush.msra.mxu0 %v426
    %v428 = vand.u32 %v229, 4294901760
    %v429 = vsub.f32 %v229, %v428
    %430 = vmatpush.msra.mxu0 %v429
    %v431 = vand.u32 %v228, 4294901760
    %v432 = vsub.f32 %v228, %v431
    %433 = vmatpush.msra.mxu0 %v432
    %v434 = vand.u32 %v227, 4294901760
    %v435 = vsub.f32 %v227, %v434
    %436 = vmatpush.msra.mxu0 %v435
    %v437 = vand.u32 %v226, 4294901760
    %v438 = vsub.f32 %v226, %v437
    %439 = vmatmul.f32.gmra.mxu0 %v438
    %v440 = vpop.f32.mrf.mxu0
    %v441 = vadd.f32 %v387, %v440
    %442 = vdwg.mxu0
    %v443 = vand.u32 %v242, 4294901760
    %444 = vmatpush.msra.mxu0 %v443
    %v445 = vand.u32 %v241, 4294901760
    %446 = vmatpush.msra.mxu0 %v445
    %v447 = vand.u32 %v240, 4294901760
    %448 = vmatpush.msra.mxu0 %v447
    %v449 = vand.u32 %v239, 4294901760
    %450 = vmatpush.msra.mxu0 %v449
    %v451 = vand.u32 %v238, 4294901760
    %452 = vmatpush.msra.mxu0 %v451
    %v453 = vand.u32 %v237, 4294901760
    %454 = vmatpush.msra.mxu0 %v453
    %v455 = vand.u32 %v236, 4294901760
    %456 = vmatpush.msra.mxu0 %v455
    %v457 = vand.u32 %v235, 4294901760
    %458 = vmatpush.msra.mxu0 %v457
    %v459 = vand.u32 %v234, 4294901760
    %460 = vmatpush.msra.mxu0 %v459
    %v461 = vand.u32 %v233, 4294901760
    %462 = vmatpush.msra.mxu0 %v461
    %v463 = vand.u32 %v232, 4294901760
    %464 = vmatpush.msra.mxu0 %v463
    %v465 = vand.u32 %v231, 4294901760
    %466 = vmatpush.msra.mxu0 %v465
    %v467 = vand.u32 %v230, 4294901760
    %468 = vmatpush.msra.mxu0 %v467
    %v469 = vand.u32 %v229, 4294901760
    %470 = vmatpush.msra.mxu0 %v469
    %v471 = vand.u32 %v228, 4294901760
    %472 = vmatpush.msra.mxu0 %v471
    %v473 = vand.u32 %v227, 4294901760
    %474 = vmatpush.msra.mxu0 %v473
    %v475 = vand.u32 %v226, 4294901760
    %v476 = vsub.f32 %v226, %v475
    %v477 = vand.u32 %v476, 4294901760
    %478 = vmatmul.f32.gmra.mxu0 %v477
    %v479 = vpop.f32.mrf.mxu0
    %v480 = vadd.f32 %v441, %v479
    %481 = vdwg.mxu0
    %v482 = vand.u32 %v242, 4294901760
    %v483 = vsub.f32 %v242, %v482
    %v484 = vand.u32 %v483, 4294901760
    %485 = vmatpush.msra.mxu0 %v484
    %v486 = vand.u32 %v241, 4294901760
    %v487 = vsub.f32 %v241, %v486
    %v488 = vand.u32 %v487, 4294901760
    %489 = vmatpush.msra.mxu0 %v488
    %v490 = vand.u32 %v240, 4294901760
    %v491 = vsub.f32 %v240, %v490
    %v492 = vand.u32 %v491, 4294901760
    %493 = vmatpush.msra.mxu0 %v492
    %v494 = vand.u32 %v239, 4294901760
    %v495 = vsub.f32 %v239, %v494
    %v496 = vand.u32 %v495, 4294901760
    %497 = vmatpush.msra.mxu0 %v496
    %v498 = vand.u32 %v238, 4294901760
    %v499 = vsub.f32 %v238, %v498
    %v500 = vand.u32 %v499, 4294901760
    %501 = vmatpush.msra.mxu0 %v500
    %v502 = vand.u32 %v237, 4294901760
    %v503 = vsub.f32 %v237, %v502
    %v504 = vand.u32 %v503, 4294901760
    %505 = vmatpush.msra.mxu0 %v504
    %v506 = vand.u32 %v236, 4294901760
    %v507 = vsub.f32 %v236, %v506
    %v508 = vand.u32 %v507, 4294901760
    %509 = vmatpush.msra.mxu0 %v508
    %v510 = vand.u32 %v235, 4294901760
    %v511 = vsub.f32 %v235, %v510
    %v512 = vand.u32 %v511, 4294901760
    %513 = vmatpush.msra.mxu0 %v512
    %v514 = vand.u32 %v234, 4294901760
    %v515 = vsub.f32 %v234, %v514
    %v516 = vand.u32 %v515, 4294901760
    %517 = vmatpush.msra.mxu0 %v516
    %v518 = vand.u32 %v233, 4294901760
    %v519 = vsub.f32 %v233, %v518
    %v520 = vand.u32 %v519, 4294901760
    %521 = vmatpush.msra.mxu0 %v520
    %v522 = vand.u32 %v232, 4294901760
    %v523 = vsub.f32 %v232, %v522
    %v524 = vand.u32 %v523, 4294901760
    %525 = vmatpush.msra.mxu0 %v524
    %v526 = vand.u32 %v231, 4294901760
    %v527 = vsub.f32 %v231, %v526
    %v528 = vand.u32 %v527, 4294901760
    %529 = vmatpush.msra.mxu0 %v528
    %v530 = vand.u32 %v230, 4294901760
    %v531 = vsub.f32 %v230, %v530
    %v532 = vand.u32 %v531, 4294901760
    %533 = vmatpush.msra.mxu0 %v532
    %v534 = vand.u32 %v229, 4294901760
    %v535 = vsub.f32 %v229, %v534
    %v536 = vand.u32 %v535, 4294901760
    %537 = vmatpush.msra.mxu0 %v536
    %v538 = vand.u32 %v228, 4294901760
    %v539 = vsub.f32 %v228, %v538
    %v540 = vand.u32 %v539, 4294901760
    %541 = vmatpush.msra.mxu0 %v540
    %v542 = vand.u32 %v227, 4294901760
    %v543 = vsub.f32 %v227, %v542
    %v544 = vand.u32 %v543, 4294901760
    %545 = vmatpush.msra.mxu0 %v544
    %v546 = vand.u32 %v226, 4294901760
    %547 = vmatmul.f32.gmra.mxu0 %v546
    %v548 = vpop.f32.mrf.mxu0
    %v549 = vadd.f32 %v480, %v548
    %550 = vdwg.mxu0
    %v551 = vand.u32 %v242, 4294901760
    %552 = vmatpush.msra.mxu0 %v551
    %v553 = vand.u32 %v241, 4294901760
    %554 = vmatpush.msra.mxu0 %v553
    %v555 = vand.u32 %v240, 4294901760
    %556 = vmatpush.msra.mxu0 %v555
    %v557 = vand.u32 %v239, 4294901760
    %558 = vmatpush.msra.mxu0 %v557
    %v559 = vand.u32 %v238, 4294901760
    %560 = vmatpush.msra.mxu0 %v559
    %v561 = vand.u32 %v237, 4294901760
    %562 = vmatpush.msra.mxu0 %v561
    %v563 = vand.u32 %v236, 4294901760
    %564 = vmatpush.msra.mxu0 %v563
    %v565 = vand.u32 %v235, 4294901760
    %566 = vmatpush.msra.mxu0 %v565
    %v567 = vand.u32 %v234, 4294901760
    %568 = vmatpush.msra.mxu0 %v567
    %v569 = vand.u32 %v233, 4294901760
    %570 = vmatpush.msra.mxu0 %v569
    %v571 = vand.u32 %v232, 4294901760
    %572 = vmatpush.msra.mxu0 %v571
    %v573 = vand.u32 %v231, 4294901760
    %574 = vmatpush.msra.mxu0 %v573
    %v575 = vand.u32 %v230, 4294901760
    %576 = vmatpush.msra.mxu0 %v575
    %v577 = vand.u32 %v229, 4294901760
    %578 = vmatpush.msra.mxu0 %v577
    %v579 = vand.u32 %v228, 4294901760
    %580 = vmatpush.msra.mxu0 %v579
    %v581 = vand.u32 %v227, 4294901760
    %582 = vmatpush.msra.mxu0 %v581
    %v583 = vand.u32 %v226, 4294901760
    %584 = vmatmul.f32.gmra.mxu0 %v583
    %v585 = vpop.f32.mrf.mxu0
    %v586 = vadd.f32 %v549, %v585
    %587 = vdwg.mxu0
    %v588 = vmax.f32 %v586, 0.0
    %v589 = vld [vmem:[%s5] sm:$0xff]
    %v590 = vld [vmem:[%s5 + $0x8] sm:$0xff]
    %v591 = vld [vmem:[%s5 + $0x10] sm:$0xff]
    %v592 = vld [vmem:[%s5 + $0x18] sm:$0xff]
    %v593 = vld [vmem:[%s5 + $0x20] sm:$0xff]
    %v594 = vld [vmem:[%s5 + $0x28] sm:$0xff]
    %v595 = vld [vmem:[%s5 + $0x30] sm:$0xff]
    %v596 = vld [vmem:[%s5 + $0x38] sm:$0xff]
    %v597 = vld [vmem:[%s5 + $0x40] sm:$0xff]
    %v598 = vld [vmem:[%s5 + $0x48] sm:$0xff]
    %v599 = vld [vmem:[%s5 + $0x50] sm:$0xff]
    %v600 = vld [vmem:[%s5 + $0x58] sm:$0xff]
    %v601 = vld [vmem:[%s5 + $0x60] sm:$0xff]
    %v602 = vld [vmem:[%s5 + $0x68] sm:$0xff]
    %v603 = vld [vmem:[%s5 + $0x70] sm:$0xff]
    %v604 = vld [vmem:[%s5 + $0x78] sm:$0xff]
    %v605 = vld [vmem:[%s6] sm:$0x1]
    %v607 = vperm.slane %v605, 0
    %v609 = vand.u32 %v604, 4294901760
    %610 = vmatpush.msra.mxu0 %v609
    %v611 = vand.u32 %v603, 4294901760
    %612 = vmatpush.msra.mxu0 %v611
    %v613 = vand.u32 %v602, 4294901760
    %614 = vmatpush.msra.mxu0 %v613
    %v615 = vand.u32 %v601, 4294901760
    %616 = vmatpush.msra.mxu0 %v615
    %v617 = vand.u32 %v600, 4294901760
    %618 = vmatpush.msra.mxu0 %v617
    %v619 = vand.u32 %v599, 4294901760
    %620 = vmatpush.msra.mxu0 %v619
    %v621 = vand.u32 %v598, 4294901760
    %622 = vmatpush.msra.mxu0 %v621
    %v623 = vand.u32 %v597, 4294901760
    %624 = vmatpush.msra.mxu0 %v623
    %v625 = vand.u32 %v596, 4294901760
    %626 = vmatpush.msra.mxu0 %v625
    %v627 = vand.u32 %v595, 4294901760
    %628 = vmatpush.msra.mxu0 %v627
    %v629 = vand.u32 %v594, 4294901760
    %630 = vmatpush.msra.mxu0 %v629
    %v631 = vand.u32 %v593, 4294901760
    %632 = vmatpush.msra.mxu0 %v631
    %v633 = vand.u32 %v592, 4294901760
    %634 = vmatpush.msra.mxu0 %v633
    %v635 = vand.u32 %v591, 4294901760
    %636 = vmatpush.msra.mxu0 %v635
    %v637 = vand.u32 %v590, 4294901760
    %638 = vmatpush.msra.mxu0 %v637
    %v639 = vand.u32 %v589, 4294901760
    %640 = vmatpush.msra.mxu0 %v639
    %v641 = vand.u32 %v588, 4294901760
    %v642 = vsub.f32 %v588, %v641
    %v643 = vand.u32 %v642, 4294901760
    %v644 = vsub.f32 %v642, %v643
    %v645 = vand.u32 %v644, 4294901760
    %646 = vmatmul.f32.gmra.mxu0 %v645
    %v647 = vpop.f32.mrf.mxu0
    %v648 = vadd.f32 %v607, %v647
    %649 = vdwg.mxu0
    %v650 = vand.u32 %v604, 4294901760
    %v651 = vsub.f32 %v604, %v650
    %v652 = vand.u32 %v651, 4294901760
    %v653 = vsub.f32 %v651, %v652
    %v654 = vand.u32 %v653, 4294901760
    %655 = vmatpush.msra.mxu0 %v654
    %v656 = vand.u32 %v603, 4294901760
    %v657 = vsub.f32 %v603, %v656
    %v658 = vand.u32 %v657, 4294901760
    %v659 = vsub.f32 %v657, %v658
    %v660 = vand.u32 %v659, 4294901760
    %661 = vmatpush.msra.mxu0 %v660
    %v662 = vand.u32 %v602, 4294901760
    %v663 = vsub.f32 %v602, %v662
    %v664 = vand.u32 %v663, 4294901760
    %v665 = vsub.f32 %v663, %v664
    %v666 = vand.u32 %v665, 4294901760
    %667 = vmatpush.msra.mxu0 %v666
    %v668 = vand.u32 %v601, 4294901760
    %v669 = vsub.f32 %v601, %v668
    %v670 = vand.u32 %v669, 4294901760
    %v671 = vsub.f32 %v669, %v670
    %v672 = vand.u32 %v671, 4294901760
    %673 = vmatpush.msra.mxu0 %v672
    %v674 = vand.u32 %v600, 4294901760
    %v675 = vsub.f32 %v600, %v674
    %v676 = vand.u32 %v675, 4294901760
    %v677 = vsub.f32 %v675, %v676
    %v678 = vand.u32 %v677, 4294901760
    %679 = vmatpush.msra.mxu0 %v678
    %v680 = vand.u32 %v599, 4294901760
    %v681 = vsub.f32 %v599, %v680
    %v682 = vand.u32 %v681, 4294901760
    %v683 = vsub.f32 %v681, %v682
    %v684 = vand.u32 %v683, 4294901760
    %685 = vmatpush.msra.mxu0 %v684
    %v686 = vand.u32 %v598, 4294901760
    %v687 = vsub.f32 %v598, %v686
    %v688 = vand.u32 %v687, 4294901760
    %v689 = vsub.f32 %v687, %v688
    %v690 = vand.u32 %v689, 4294901760
    %691 = vmatpush.msra.mxu0 %v690
    %v692 = vand.u32 %v597, 4294901760
    %v693 = vsub.f32 %v597, %v692
    %v694 = vand.u32 %v693, 4294901760
    %v695 = vsub.f32 %v693, %v694
    %v696 = vand.u32 %v695, 4294901760
    %697 = vmatpush.msra.mxu0 %v696
    %v698 = vand.u32 %v596, 4294901760
    %v699 = vsub.f32 %v596, %v698
    %v700 = vand.u32 %v699, 4294901760
    %v701 = vsub.f32 %v699, %v700
    %v702 = vand.u32 %v701, 4294901760
    %703 = vmatpush.msra.mxu0 %v702
    %v704 = vand.u32 %v595, 4294901760
    %v705 = vsub.f32 %v595, %v704
    %v706 = vand.u32 %v705, 4294901760
    %v707 = vsub.f32 %v705, %v706
    %v708 = vand.u32 %v707, 4294901760
    %709 = vmatpush.msra.mxu0 %v708
    %v710 = vand.u32 %v594, 4294901760
    %v711 = vsub.f32 %v594, %v710
    %v712 = vand.u32 %v711, 4294901760
    %v713 = vsub.f32 %v711, %v712
    %v714 = vand.u32 %v713, 4294901760
    %715 = vmatpush.msra.mxu0 %v714
    %v716 = vand.u32 %v593, 4294901760
    %v717 = vsub.f32 %v593, %v716
    %v718 = vand.u32 %v717, 4294901760
    %v719 = vsub.f32 %v717, %v718
    %v720 = vand.u32 %v719, 4294901760
    %721 = vmatpush.msra.mxu0 %v720
    %v722 = vand.u32 %v592, 4294901760
    %v723 = vsub.f32 %v592, %v722
    %v724 = vand.u32 %v723, 4294901760
    %v725 = vsub.f32 %v723, %v724
    %v726 = vand.u32 %v725, 4294901760
    %727 = vmatpush.msra.mxu0 %v726
    %v728 = vand.u32 %v591, 4294901760
    %v729 = vsub.f32 %v591, %v728
    %v730 = vand.u32 %v729, 4294901760
    %v731 = vsub.f32 %v729, %v730
    %v732 = vand.u32 %v731, 4294901760
    %733 = vmatpush.msra.mxu0 %v732
    %v734 = vand.u32 %v590, 4294901760
    %v735 = vsub.f32 %v590, %v734
    %v736 = vand.u32 %v735, 4294901760
    %v737 = vsub.f32 %v735, %v736
    %v738 = vand.u32 %v737, 4294901760
    %739 = vmatpush.msra.mxu0 %v738
    %v740 = vand.u32 %v589, 4294901760
    %v741 = vsub.f32 %v589, %v740
    %v742 = vand.u32 %v741, 4294901760
    %v743 = vsub.f32 %v741, %v742
    %v744 = vand.u32 %v743, 4294901760
    %745 = vmatpush.msra.mxu0 %v744
    %v746 = vand.u32 %v588, 4294901760
    %747 = vmatmul.f32.gmra.mxu0 %v746
    %v748 = vpop.f32.mrf.mxu0
    %v749 = vadd.f32 %v648, %v748
    %750 = vdwg.mxu0
    %v751 = vand.u32 %v604, 4294901760
    %v752 = vsub.f32 %v604, %v751
    %753 = vmatpush.msra.mxu0 %v752
    %v754 = vand.u32 %v603, 4294901760
    %v755 = vsub.f32 %v603, %v754
    %756 = vmatpush.msra.mxu0 %v755
    %v757 = vand.u32 %v602, 4294901760
    %v758 = vsub.f32 %v602, %v757
    %759 = vmatpush.msra.mxu0 %v758
    %v760 = vand.u32 %v601, 4294901760
    %v761 = vsub.f32 %v601, %v760
    %762 = vmatpush.msra.mxu0 %v761
    %v763 = vand.u32 %v600, 4294901760
    %v764 = vsub.f32 %v600, %v763
    %765 = vmatpush.msra.mxu0 %v764
    %v766 = vand.u32 %v599, 4294901760
    %v767 = vsub.f32 %v599, %v766
    %768 = vmatpush.msra.mxu0 %v767
    %v769 = vand.u32 %v598, 4294901760
    %v770 = vsub.f32 %v598, %v769
    %771 = vmatpush.msra.mxu0 %v770
    %v772 = vand.u32 %v597, 4294901760
    %v773 = vsub.f32 %v597, %v772
    %774 = vmatpush.msra.mxu0 %v773
    %v775 = vand.u32 %v596, 4294901760
    %v776 = vsub.f32 %v596, %v775
    %777 = vmatpush.msra.mxu0 %v776
    %v778 = vand.u32 %v595, 4294901760
    %v779 = vsub.f32 %v595, %v778
    %780 = vmatpush.msra.mxu0 %v779
    %v781 = vand.u32 %v594, 4294901760
    %v782 = vsub.f32 %v594, %v781
    %783 = vmatpush.msra.mxu0 %v782
    %v784 = vand.u32 %v593, 4294901760
    %v785 = vsub.f32 %v593, %v784
    %786 = vmatpush.msra.mxu0 %v785
    %v787 = vand.u32 %v592, 4294901760
    %v788 = vsub.f32 %v592, %v787
    %789 = vmatpush.msra.mxu0 %v788
    %v790 = vand.u32 %v591, 4294901760
    %v791 = vsub.f32 %v591, %v790
    %792 = vmatpush.msra.mxu0 %v791
    %v793 = vand.u32 %v590, 4294901760
    %v794 = vsub.f32 %v590, %v793
    %795 = vmatpush.msra.mxu0 %v794
    %v796 = vand.u32 %v589, 4294901760
    %v797 = vsub.f32 %v589, %v796
    %798 = vmatpush.msra.mxu0 %v797
    %v799 = vand.u32 %v588, 4294901760
    %v800 = vsub.f32 %v588, %v799
    %801 = vmatmul.f32.gmra.mxu0 %v800
    %v802 = vpop.f32.mrf.mxu0
    %v803 = vadd.f32 %v749, %v802
    %804 = vdwg.mxu0
    %v805 = vand.u32 %v604, 4294901760
    %806 = vmatpush.msra.mxu0 %v805
    %v807 = vand.u32 %v603, 4294901760
    %808 = vmatpush.msra.mxu0 %v807
    %v809 = vand.u32 %v602, 4294901760
    %810 = vmatpush.msra.mxu0 %v809
    %v811 = vand.u32 %v601, 4294901760
    %812 = vmatpush.msra.mxu0 %v811
    %v813 = vand.u32 %v600, 4294901760
    %814 = vmatpush.msra.mxu0 %v813
    %v815 = vand.u32 %v599, 4294901760
    %816 = vmatpush.msra.mxu0 %v815
    %v817 = vand.u32 %v598, 4294901760
    %818 = vmatpush.msra.mxu0 %v817
    %v819 = vand.u32 %v597, 4294901760
    %820 = vmatpush.msra.mxu0 %v819
    %v821 = vand.u32 %v596, 4294901760
    %822 = vmatpush.msra.mxu0 %v821
    %v823 = vand.u32 %v595, 4294901760
    %824 = vmatpush.msra.mxu0 %v823
    %v825 = vand.u32 %v594, 4294901760
    %826 = vmatpush.msra.mxu0 %v825
    %v827 = vand.u32 %v593, 4294901760
    %828 = vmatpush.msra.mxu0 %v827
    %v829 = vand.u32 %v592, 4294901760
    %830 = vmatpush.msra.mxu0 %v829
    %v831 = vand.u32 %v591, 4294901760
    %832 = vmatpush.msra.mxu0 %v831
    %v833 = vand.u32 %v590, 4294901760
    %834 = vmatpush.msra.mxu0 %v833
    %v835 = vand.u32 %v589, 4294901760
    %836 = vmatpush.msra.mxu0 %v835
    %v837 = vand.u32 %v588, 4294901760
    %v838 = vsub.f32 %v588, %v837
    %v839 = vand.u32 %v838, 4294901760
    %840 = vmatmul.f32.gmra.mxu0 %v839
    %v841 = vpop.f32.mrf.mxu0
    %v842 = vadd.f32 %v803, %v841
    %843 = vdwg.mxu0
    %v844 = vand.u32 %v604, 4294901760
    %v845 = vsub.f32 %v604, %v844
    %v846 = vand.u32 %v845, 4294901760
    %847 = vmatpush.msra.mxu0 %v846
    %v848 = vand.u32 %v603, 4294901760
    %v849 = vsub.f32 %v603, %v848
    %v850 = vand.u32 %v849, 4294901760
    %851 = vmatpush.msra.mxu0 %v850
    %v852 = vand.u32 %v602, 4294901760
    %v853 = vsub.f32 %v602, %v852
    %v854 = vand.u32 %v853, 4294901760
    %855 = vmatpush.msra.mxu0 %v854
    %v856 = vand.u32 %v601, 4294901760
    %v857 = vsub.f32 %v601, %v856
    %v858 = vand.u32 %v857, 4294901760
    %859 = vmatpush.msra.mxu0 %v858
    %v860 = vand.u32 %v600, 4294901760
    %v861 = vsub.f32 %v600, %v860
    %v862 = vand.u32 %v861, 4294901760
    %863 = vmatpush.msra.mxu0 %v862
    %v864 = vand.u32 %v599, 4294901760
    %v865 = vsub.f32 %v599, %v864
    %v866 = vand.u32 %v865, 4294901760
    %867 = vmatpush.msra.mxu0 %v866
    %v868 = vand.u32 %v598, 4294901760
    %v869 = vsub.f32 %v598, %v868
    %v870 = vand.u32 %v869, 4294901760
    %871 = vmatpush.msra.mxu0 %v870
    %v872 = vand.u32 %v597, 4294901760
    %v873 = vsub.f32 %v597, %v872
    %v874 = vand.u32 %v873, 4294901760
    %875 = vmatpush.msra.mxu0 %v874
    %v876 = vand.u32 %v596, 4294901760
    %v877 = vsub.f32 %v596, %v876
    %v878 = vand.u32 %v877, 4294901760
    %879 = vmatpush.msra.mxu0 %v878
    %v880 = vand.u32 %v595, 4294901760
    %v881 = vsub.f32 %v595, %v880
    %v882 = vand.u32 %v881, 4294901760
    %883 = vmatpush.msra.mxu0 %v882
    %v884 = vand.u32 %v594, 4294901760
    %v885 = vsub.f32 %v594, %v884
    %v886 = vand.u32 %v885, 4294901760
    %887 = vmatpush.msra.mxu0 %v886
    %v888 = vand.u32 %v593, 4294901760
    %v889 = vsub.f32 %v593, %v888
    %v890 = vand.u32 %v889, 4294901760
    %891 = vmatpush.msra.mxu0 %v890
    %v892 = vand.u32 %v592, 4294901760
    %v893 = vsub.f32 %v592, %v892
    %v894 = vand.u32 %v893, 4294901760
    %895 = vmatpush.msra.mxu0 %v894
    %v896 = vand.u32 %v591, 4294901760
    %v897 = vsub.f32 %v591, %v896
    %v898 = vand.u32 %v897, 4294901760
    %899 = vmatpush.msra.mxu0 %v898
    %v900 = vand.u32 %v590, 4294901760
    %v901 = vsub.f32 %v590, %v900
    %v902 = vand.u32 %v901, 4294901760
    %903 = vmatpush.msra.mxu0 %v902
    %v904 = vand.u32 %v589, 4294901760
    %v905 = vsub.f32 %v589, %v904
    %v906 = vand.u32 %v905, 4294901760
    %907 = vmatpush.msra.mxu0 %v906
    %v908 = vand.u32 %v588, 4294901760
    %909 = vmatmul.f32.gmra.mxu0 %v908
    %v910 = vpop.f32.mrf.mxu0
    %v911 = vadd.f32 %v842, %v910
    %912 = vdwg.mxu0
    %v913 = vand.u32 %v604, 4294901760
    %914 = vmatpush.msra.mxu0 %v913
    %v915 = vand.u32 %v603, 4294901760
    %916 = vmatpush.msra.mxu0 %v915
    %v917 = vand.u32 %v602, 4294901760
    %918 = vmatpush.msra.mxu0 %v917
    %v919 = vand.u32 %v601, 4294901760
    %920 = vmatpush.msra.mxu0 %v919
    %v921 = vand.u32 %v600, 4294901760
    %922 = vmatpush.msra.mxu0 %v921
    %v923 = vand.u32 %v599, 4294901760
    %924 = vmatpush.msra.mxu0 %v923
    %v925 = vand.u32 %v598, 4294901760
    %926 = vmatpush.msra.mxu0 %v925
    %v927 = vand.u32 %v597, 4294901760
    %928 = vmatpush.msra.mxu0 %v927
    %v929 = vand.u32 %v596, 4294901760
    %930 = vmatpush.msra.mxu0 %v929
    %v931 = vand.u32 %v595, 4294901760
    %932 = vmatpush.msra.mxu0 %v931
    %v933 = vand.u32 %v594, 4294901760
    %934 = vmatpush.msra.mxu0 %v933
    %v935 = vand.u32 %v593, 4294901760
    %936 = vmatpush.msra.mxu0 %v935
    %v937 = vand.u32 %v592, 4294901760
    %938 = vmatpush.msra.mxu0 %v937
    %v939 = vand.u32 %v591, 4294901760
    %940 = vmatpush.msra.mxu0 %v939
    %v941 = vand.u32 %v590, 4294901760
    %942 = vmatpush.msra.mxu0 %v941
    %v943 = vand.u32 %v589, 4294901760
    %944 = vmatpush.msra.mxu0 %v943
    %v945 = vand.u32 %v588, 4294901760
    %946 = vmatmul.f32.gmra.mxu0 %v945
    %v947 = vpop.f32.mrf.mxu0
    %v948 = vadd.f32 %v911, %v947
    %949 = vdwg.mxu0
    %vm950 = vcmask 31744
    %951 = vst.msk [vmem:[%s7] sm:$0xff] %vm950, %v948
    // Predicated region
    $region38: #{tpu_custom_call.1} parent=1 // pred_check
      _
    $region39: #{tpu_custom_call.1} parent=1 // pred_check_branch
      %953 = sbr.rel (0) target = $region41
    $region40: #{tpu_custom_call.1} parent=1 // pred_region
      _
    $region41: #{tpu_custom_call.1} parent=1 // pred_fallthru
      _
    // Predicated region
    $region42: #{tpu_custom_call.1} parent=1 // pred_check
      _
    $region43: #{tpu_custom_call.1} parent=1 // pred_check_branch
      %955 = sbr.rel (0) target = $region45
    $region44: #{tpu_custom_call.1} parent=1 // pred_region
      _
    $region45: #{tpu_custom_call.1} parent=1 // pred_fallthru
      _
    %956 = vsyncpa [#allocation3], 1
    %957 = vsyncpa [#allocation5], 1

</llo_original>
